<compile_context>
chip_gen: v5e
topology: v5e:2x2
jax: 0.10.0
libtpu: 0.0.40
codegen_flags: <defaults>
</compile_context>

<pallas_src>
import functools

import jax
import jax.numpy as jnp
from jax.experimental import pallas as pl
from jax.experimental.pallas import tpu as pltpu

LANES = 128      # lane-dense padded width for hidden state / fused head output
TILE_CAP = 1024  # max batch-tile rows (per-step overhead amortized >= 85% roofline)
MIN_TILE = 64    # don't split the batch into tiles smaller than this


def _round_up(x, m):
    return (x + m - 1) // m * m


def _choose_tiling(batch):
    """Pick (b_tile, padded_batch).

    Tiny batches -> single tile (grid=1, zero step overhead, usually no pad).
    Larger batches -> even grid >= 4 (>= 2 steps per TensorCore on v7x) with
    tiles capped at TILE_CAP rows. b_tile is always a multiple of 8.
    """
    bp8 = _round_up(batch, 8)
    if bp8 < 4 * MIN_TILE:
        return bp8, bp8                       # one tile covers everything
    ntiles = pl.cdiv(bp8, TILE_CAP)
    if ntiles < 4:
        ntiles = 4                            # >= 2 steps per v7x TensorCore
    if ntiles % 2:
        ntiles += 1                           # even grid: both TCs get work
    b_tile = _round_up(pl.cdiv(bp8, ntiles), 8)
    return b_tile, b_tile * ntiles


def pack_params(params, nr_input_features, nr_actions, nr_hidden_units,
                dtype=jnp.float32):
    """Pack all A2CNetSplit parameters into one lane-dense (R, 128) slab.

    Layout (rows):
      [0 : Fp)              fused first-layer weight  [pw1 | vw1]      (Fp, 128)
      [Fp : Fp+128)         block-diag second layer   diag(pw2, vw2)   (128, 128)
      [Fp+128 : Fp+256)     fused head weight [lw | sw | vw3]          (128, 128)
      [Fp+256 : Fp+264)     bias block: row0=b1, row1=b2, row2=b3      (8, 128)
    """
    F, H, A = nr_input_features, nr_hidden_units, nr_actions
    assert 2 * H <= LANES, "fused hidden width 2H must fit in 128 lanes"
    assert 2 * A + 1 <= LANES, "fused head width 2A+1 must fit in 128 lanes"
    Fp = _round_up(F, 8)  # keep every slab section sublane (8-row) aligned

    # Layer 1: x @ W1 -> [policy hidden | value hidden]  (shared-input fusion)
    w1 = jnp.zeros((Fp, LANES), jnp.float32)
    w1 = w1.at[:F, :H].set(params["pw1"])
    w1 = w1.at[:F, H:2 * H].set(params["vw1"])
    b1 = jnp.zeros((LANES,), jnp.float32)
    b1 = b1.at[:H].set(params["pb1"]).at[H:2 * H].set(params["vb1"])

    # Layer 2: block-diagonal so one 128-wide matmul advances both branches.
    w2 = jnp.zeros((LANES, LANES), jnp.float32)
    w2 = w2.at[:H, :H].set(params["pw2"])
    w2 = w2.at[H:2 * H, H:2 * H].set(params["vw2"])
    b2 = jnp.zeros((LANES,), jnp.float32)
    b2 = b2.at[:H].set(params["pb2"]).at[H:2 * H].set(params["vb2"])

    # Heads: lanes [0:A]=loc (tanh), [A:2A]=scale (sigmoid), [2A]=value.
    w3 = jnp.zeros((LANES, LANES), jnp.float32)
    w3 = w3.at[:H, :A].set(params["lw"])
    w3 = w3.at[:H, A:2 * A].set(params["sw"])
    w3 = w3.at[H:2 * H, 2 * A:2 * A + 1].set(params["vw3"])
    b3 = jnp.zeros((LANES,), jnp.float32)
    b3 = b3.at[:A].set(params["lb"]).at[A:2 * A].set(params["sb"])
    b3 = b3.at[2 * A].set(params["vb3"][0])

    bias_block = jnp.zeros((8, LANES), jnp.float32)
    bias_block = bias_block.at[0].set(b1).at[1].set(b2).at[2].set(b3)

    slab = jnp.concatenate([w1, w2, w3, bias_block], axis=0)  # (Fp + 264, 128)
    return slab.astype(dtype), Fp


def _a2c_kernel(x_ref, slab_ref, out_ref, *, fp, nr_actions, w_dtype):
    a = nr_actions
    x = x_ref[...].astype(w_dtype)  # (Bt, Fp); no-op when slab is f32

    # Static, sublane-aligned slices of the resident parameter slab.
    w1 = slab_ref[0:fp, :]                       # (Fp, 128)
    w2 = slab_ref[fp:fp + LANES, :]              # (128, 128)
    w3 = slab_ref[fp + LANES:fp + 2 * LANES, :]  # (128, 128)
    r = fp + 2 * LANES
    biases = slab_ref[r:r + 8, :].astype(jnp.float32)  # (8, 128) aligned tile
    b1 = biases[0:1, :]
    b2 = biases[1:2, :]
    b3 = biases[2:3, :]

    # Three fused MXU passes; zero-padded lanes/rows contribute exact zeros.
    h = jnp.maximum(jnp.dot(x, w1, preferred_element_type=jnp.float32) + b1, 0.0)
    g = jnp.maximum(
        jnp.dot(h.astype(w_dtype), w2, preferred_element_type=jnp.float32) + b2,
        0.0)
    z = jnp.dot(g.astype(w_dtype), w3,
                preferred_element_type=jnp.float32) + b3  # (Bt, 128)

    # Per-lane activation with a SINGLE transcendental pass:
    #   loc lanes   : tanh(z)   = 2*sigmoid(2z) - 1
    #   scale lanes : sigmoid(z)
    #   value lane  : identity
    lane = jax.lax.broadcasted_iota(jnp.int32, z.shape, 1)
    is_loc = lane < a
    is_head = lane < 2 * a
    s = jax.nn.sigmoid(jnp.where(is_loc, 2.0 * z, z))   # one EUP sweep
    act = jnp.where(is_loc, 2.0 * s - 1.0, s)
    out_ref[...] = jnp.where(is_head, act, z)           # lane-dense unmasked vst


def a2c_net_split_forward(x, params, nr_actions, nr_hidden_units, *,
                          param_dtype=jnp.float32):
    """x: [B, F] float32. Returns ((loc [B,A], scale [B,A]), value [B,1])."""
    B, F = x.shape
    A = nr_actions

    slab, fp = pack_params(params, F, A, nr_hidden_units, dtype=param_dtype)
    b_tile, Bp = _choose_tiling(B)

    # Skip the wrapper-side pad entirely in the common divisible case.
    if Bp == B and fp == F:
        xp = x
    else:
        xp = jnp.zeros((Bp, fp), x.dtype).at[:B, :F].set(x)

    kernel = functools.partial(_a2c_kernel, fp=fp, nr_actions=A,
                               w_dtype=param_dtype)

    itemsize = jnp.dtype(param_dtype).itemsize
    cost = pl.CostEstimate(
        flops=2 * Bp * (fp + 2 * LANES) * LANES,      # 3 fused MXU passes
        transcendentals=Bp * LANES,                   # one sigmoid sweep / row
        bytes_accessed=(Bp * fp * xp.dtype.itemsize
                        + slab.size * itemsize
                        + Bp * LANES * 4),
    )

    out = pl.pallas_call(
        kernel,
        out_shape=jax.ShapeDtypeStruct((Bp, LANES), jnp.float32),
        grid_spec=pltpu.PrefetchScalarGridSpec(
            num_scalar_prefetch=0,
            grid=(Bp // b_tile,),
            in_specs=[
                pl.BlockSpec((b_tile, fp), lambda i: (i, 0)),   # x tiles
                pl.BlockSpec(slab.shape, lambda i: (0, 0)),     # resident weights
            ],
            out_specs=pl.BlockSpec((b_tile, LANES), lambda i: (i, 0)),
        ),
        compiler_params=pltpu.CompilerParams(
            dimension_semantics=("parallel",)),  # shard batch across TCs on v7x
        cost_estimate=cost,
    )(xp, slab)

    loc = out[:B, :A]
    scale = out[:B, A:2 * A]
    value = out[:B, 2 * A:2 * A + 1]
    return (loc, scale), value


def init_params(key, nr_input_features, nr_actions, nr_hidden_units):
    """PyTorch-style uniform fan-in init. Weights stored transposed as (in, out)."""
    def linear(key, fan_in, fan_out):
        kw, kb = jax.random.split(key)
        bound = 1.0 / float(fan_in) ** 0.5
        w = jax.random.uniform(kw, (fan_in, fan_out), jnp.float32, -bound, bound)
        b = jax.random.uniform(kb, (fan_out,), jnp.float32, -bound, bound)
        return w, b

    keys = jax.random.split(key, 7)
    F, H, A = nr_input_features, nr_hidden_units, nr_actions
    p = {}
    p["pw1"], p["pb1"] = linear(keys[0], F, H)
    p["pw2"], p["pb2"] = linear(keys[1], H, H)
    p["lw"], p["lb"] = linear(keys[2], H, A)
    p["sw"], p["sb"] = linear(keys[3], H, A)
    p["vw1"], p["vb1"] = linear(keys[4], F, H)
    p["vw2"], p["vb2"] = linear(keys[5], H, H)
    p["vw3"], p["vb3"] = linear(keys[6], H, 1)
    return p


def reference_forward(x, p):
    relu = lambda t: jnp.maximum(t, 0.0)
    h = relu(x @ p["pw1"] + p["pb1"])
    h = relu(h @ p["pw2"] + p["pb2"])
    loc = jnp.tanh(h @ p["lw"] + p["lb"])
    scale = jax.nn.sigmoid(h @ p["sw"] + p["sb"])
    v = relu(x @ p["vw1"] + p["vb1"])
    v = relu(v @ p["vw2"] + p["vb2"])
    value = v @ p["vw3"] + p["vb3"]
    return (loc, scale), value


if __name__ == "__main__":
    # batch, input features, hidden units (module default 64), actions
    B, F, H, A = 256, 16, 64, 4

    key = jax.random.PRNGKey(0)
    kx, kp = jax.random.split(key)
    x = jax.random.normal(kx, (B, F), jnp.float32)
    params = init_params(kp, F, A, H)

    (loc, scale), value = a2c_net_split_forward(x, params, A, H)
    jax.block_until_ready((loc, scale, value))

    (rloc, rscale), rvalue = reference_forward(x, params)
    assert loc.shape == (B, A) and scale.shape == (B, A) and value.shape == (B, 1)
    assert jnp.allclose(loc, rloc, atol=2e-5), "loc mismatch"
    assert jnp.allclose(scale, rscale, atol=2e-5), "scale mismatch"
    assert jnp.allclose(value, rvalue, atol=2e-5), "value mismatch"

    print("KERNEL_OK")
</pallas_src>

<mosaic_0001>
module attributes {stable_mosaic.version = 11 : i64} {
  func.func @_a2c_kernel(%arg0: i32, %arg1: memref<64x16xf32, #tpu.memory_space<vmem>>, %arg2: memref<280x128xf32, #tpu.memory_space<vmem>>, %arg3: memref<64x128xf32, #tpu.memory_space<vmem>>) attributes {dimension_semantics = [#tpu.dimension_semantics<parallel>], iteration_bounds = array<i64: 4>, scalar_prefetch = 0 : i64, scratch_operands = 0 : i64, tpu.core_type = #tpu.core_type<tc>, window_params = [{transform_indices = @transform_0, window_bounds = array<i64: 64, 16>}, {pipeline_mode = #tpu.pipeline_mode<synchronous>, transform_indices = @transform_1, window_bounds = array<i64: 280, 128>}, {transform_indices = @transform_2, window_bounds = array<i64: 64, 128>}]} {
    %c0 = arith.constant 0 : index
    %c0_0 = arith.constant 0 : index
    %0 = vector.load %arg1[%c0, %c0_0] : memref<64x16xf32, #tpu.memory_space<vmem>>, vector<64x16xf32>
    %c0_1 = arith.constant 0 : index
    %c0_2 = arith.constant 0 : index
    %1 = vector.load %arg2[%c0_1, %c0_2] : memref<280x128xf32, #tpu.memory_space<vmem>>, vector<16x128xf32>
    %c16 = arith.constant 16 : index
    %c0_3 = arith.constant 0 : index
    %2 = vector.load %arg2[%c16, %c0_3] : memref<280x128xf32, #tpu.memory_space<vmem>>, vector<128x128xf32>
    %c144 = arith.constant 144 : index
    %c0_4 = arith.constant 0 : index
    %3 = vector.load %arg2[%c144, %c0_4] : memref<280x128xf32, #tpu.memory_space<vmem>>, vector<128x128xf32>
    %c272 = arith.constant 272 : index
    %c0_5 = arith.constant 0 : index
    %4 = vector.load %arg2[%c272, %c0_5] : memref<280x128xf32, #tpu.memory_space<vmem>>, vector<8x128xf32>
    %5 = vector.extract_strided_slice %4 {offsets = [0, 0], sizes = [1, 128], strides = [1, 1]} : vector<8x128xf32> to vector<1x128xf32>
    %6 = vector.extract_strided_slice %4 {offsets = [1, 0], sizes = [1, 128], strides = [1, 1]} : vector<8x128xf32> to vector<1x128xf32>
    %7 = vector.extract_strided_slice %4 {offsets = [2, 0], sizes = [1, 128], strides = [1, 1]} : vector<8x128xf32> to vector<1x128xf32>
    %cst = arith.constant dense<0.000000e+00> : vector<64x128xf32>
    %8 = tpu.matmul %0, %1, %cst {dimension_numbers = #tpu.dot_dimension_numbers<[1], [0], [0], [1], [0, 0, 1, 1], [], []>} : vector<64x16xf32>, vector<16x128xf32>, vector<64x128xf32> -> vector<64x128xf32>
    %9 = vector.broadcast %5 : vector<1x128xf32> to vector<64x128xf32>
    %10 = arith.addf %8, %9 : vector<64x128xf32>
    %cst_6 = arith.constant 0.000000e+00 : f32
    %11 = vector.broadcast %cst_6 : f32 to vector<64x128xf32>
    %12 = arith.maximumf %10, %11 : vector<64x128xf32>
    %cst_7 = arith.constant dense<0.000000e+00> : vector<64x128xf32>
    %13 = tpu.matmul %12, %2, %cst_7 {dimension_numbers = #tpu.dot_dimension_numbers<[1], [0], [0], [1], [0, 0, 1, 1], [], []>} : vector<64x128xf32>, vector<128x128xf32>, vector<64x128xf32> -> vector<64x128xf32>
    %14 = vector.broadcast %6 : vector<1x128xf32> to vector<64x128xf32>
    %15 = arith.addf %13, %14 : vector<64x128xf32>
    %cst_8 = arith.constant 0.000000e+00 : f32
    %16 = vector.broadcast %cst_8 : f32 to vector<64x128xf32>
    %17 = arith.maximumf %15, %16 : vector<64x128xf32>
    %cst_9 = arith.constant dense<0.000000e+00> : vector<64x128xf32>
    %18 = tpu.matmul %17, %3, %cst_9 {dimension_numbers = #tpu.dot_dimension_numbers<[1], [0], [0], [1], [0, 0, 1, 1], [], []>} : vector<64x128xf32>, vector<128x128xf32>, vector<64x128xf32> -> vector<64x128xf32>
    %19 = vector.broadcast %7 : vector<1x128xf32> to vector<64x128xf32>
    %20 = arith.addf %18, %19 : vector<64x128xf32>
    %21 = tpu.iota {dimensions = array<i32: 1>} : vector<64x128xi32>
    %c4_i32 = arith.constant 4 : i32
    %22 = vector.broadcast %c4_i32 : i32 to vector<64x128xi32>
    %23 = arith.cmpi slt, %21, %22 : vector<64x128xi32>
    %c8_i32 = arith.constant 8 : i32
    %24 = vector.broadcast %c8_i32 : i32 to vector<64x128xi32>
    %25 = arith.cmpi slt, %21, %24 : vector<64x128xi32>
    %cst_10 = arith.constant 2.000000e+00 : f32
    %26 = vector.broadcast %cst_10 : f32 to vector<64x128xf32>
    %27 = arith.mulf %26, %20 : vector<64x128xf32>
    %28 = arith.select %23, %27, %20 : vector<64x128xi1>, vector<64x128xf32>
    %29 = arith.negf %28 : vector<64x128xf32>
    %30 = math.exp %29 : vector<64x128xf32>
    %cst_11 = arith.constant 1.000000e+00 : f32
    %31 = vector.broadcast %cst_11 : f32 to vector<64x128xf32>
    %32 = arith.addf %31, %30 : vector<64x128xf32>
    %33 = arith.divf %31, %32 : vector<64x128xf32>
    %cst_12 = arith.constant 2.000000e+00 : f32
    %34 = vector.broadcast %cst_12 : f32 to vector<64x128xf32>
    %35 = arith.mulf %34, %33 : vector<64x128xf32>
    %cst_13 = arith.constant 1.000000e+00 : f32
    %36 = vector.broadcast %cst_13 : f32 to vector<64x128xf32>
    %37 = arith.subf %35, %36 : vector<64x128xf32>
    %38 = arith.select %23, %37, %33 : vector<64x128xi1>, vector<64x128xf32>
    %39 = arith.select %25, %38, %20 : vector<64x128xi1>, vector<64x128xf32>
    %c0_14 = arith.constant 0 : index
    %c0_15 = arith.constant 0 : index
    %40 = vector.load %arg3[%c0_14, %c0_15] : memref<64x128xf32, #tpu.memory_space<vmem>>, vector<64x128xf32>
    tpu.vector_store %arg3[%c0_14, %c0_15], %39 {strides = array<i32>} : memref<64x128xf32, #tpu.memory_space<vmem>>, vector<64x128xf32>,
    return
  }
  func.func @transform_0(%arg0: i32) -> (i32, i32) {
    %c0_i32 = arith.constant 0 : i32
    %c0_i32_0 = arith.constant 0 : i32
    return %arg0, %c0_i32 : i32, i32
  }
  func.func @transform_1(%arg0: i32) -> (i32, i32) {
    %c0_i32 = arith.constant 0 : i32
    %c0_i32_0 = arith.constant 0 : i32
    %c0_i32_1 = arith.constant 0 : i32
    return %c0_i32, %c0_i32_0 : i32, i32
  }
  func.func @transform_2(%arg0: i32) -> (i32, i32) {
    %c0_i32 = arith.constant 0 : i32
    %c0_i32_0 = arith.constant 0 : i32
    return %arg0, %c0_i32 : i32, i32
  }
}

</mosaic_0001>

<llo_original>
// kernel: tpu_custom_call.1
$region0: #{tpu_custom_call.1}
  #allocation0 [shape = 'u32[]', space=smem, size = 0x4, offset = 0x4, fixed_abs, tag = 'smem constant byte address 0x4 - core index']
  #allocation1 [shape = 'u32[72,128]{1,0:T(1,128)}', space=vmem, size = 0x9000, scoped, tag = 'internal scratch']
  %s0 = inlined_call_operand.vmem [shape: f32[256,16], index: 0, kind: input, shape index: {}]
  %s1 = inlined_call_operand.vmem [shape: f32[280,128], index: 1, kind: input, shape index: {}]
  %s2 = inlined_call_operand.hbm [shape: f32[256,128], index: 2, kind: output, shape index: {}]
  %s3 = sld [smem:[#allocation0]]
  $region41: #{tpu_custom_call.1} parent=0
    _
  %s5 = ssub.s32 1, %s3
  %s6 = scalar_select 0, %s5, %s3
  $region1: #{tpu_custom_call.1} parent=0
    #allocation2 [shape = 'u8[65536]{0}', space=vmem, size = 0x10000, scoped, tag = 'output window, operand 0']
    #allocation3 [shape = 's32[2]{0}', space=sflag, size = 0x8, scoped, tag = 'scoped memory for tpu_custom_call.1']
    %7 = vsyncpa [#allocation3], 0
    %s8 = scalar_lea.sflag [#allocation3], 1
    %9 = vsyncpa %s8, 0
    loop: start=0, step=1, limit=6
    $region2: #{tpu_custom_call.1} parent=1 // loop_pre_header
      _
    $region3: #{tpu_custom_call.1} parent=1 // loop_header
      %s11 = sphi 0, %s15
      %p12 = scmp.ge.s32.totalorder %s11, 6
      %s21 = sphi 0, %s23
      %s24 = sphi 0, %s21
      %s25 = sphi 0, %s24
      %s41 = sphi 0, %s25
      %s45 = sphi 0, %s45
      %s47 = sphi 0, %s45
      %s48 = sphi 0, %s47
      %s62 = sphi 0, %s48
      %s68 = sphi 0, %s70
      %s71 = sphi 0, %s68
      %s72 = sphi 0, %s71
      %s88 = sphi 0, %s72
    $region4: #{tpu_custom_call.1} parent=1 // loop_header_branch
      %14 = sbr.rel (%p12) target = $region8
    $region5: #{tpu_custom_call.1} parent=1 // loop_body
      %s16 = ssub.s32 %s11, 1
      %s17 = ssub.s32 %s11, 2
      %s18 = sadd.s32 %s11, 1
      %s19 = ssub.s32 %s11, %s18
      %p20 = scmp.eq.s32.totalorder %s19, 0
      %s22 = sadd.s32 %s21, 1
      %s23 = scalar_select %p20, %s21, %s22
      %p26 = pneg %p20
      %p27 = scmp.eq.s32.totalorder %s11, 3
      %p28 = por %p26, %p27
      %p29 = scmp.ne.s32.totalorder %s21, %s24
      %p30 = scmp.eq.s32.totalorder %s11, 0
      %p31 = por %p29, %p30
      %p32 = scmp.ne.s32.totalorder %s21, %s24
      %p33 = scmp.eq.s32.totalorder %s16, 3
      %p34 = por %p32, %p33
      %p35 = scmp.ne.s32.totalorder %s24, %s25
      %p36 = scmp.eq.s32.totalorder %s16, 0
      %p37 = por %p35, %p36
      %p38 = scmp.ne.s32.totalorder %s24, %s25
      %p39 = scmp.eq.s32.totalorder %s17, 3
      %p40 = por %p38, %p39
      %p42 = scmp.ne.s32.totalorder %s25, %s41
      %p43 = scmp.eq.s32.totalorder %s17, 0
      %p44 = por %p42, %p43
      %s46 = sadd.s32 %s45, 1
      %p49 = scmp.eq.s32.totalorder %s11, 3
      %p50 = scmp.ne.s32.totalorder %s45, %s47
      %p51 = scmp.eq.s32.totalorder %s11, 0
      %p52 = por %p50, %p51
      %p53 = scmp.ne.s32.totalorder %s45, %s47
      %p54 = scmp.eq.s32.totalorder %s16, 3
      %p55 = por %p53, %p54
      %p56 = scmp.ne.s32.totalorder %s47, %s48
      %p57 = scmp.eq.s32.totalorder %s16, 0
      %p58 = por %p56, %p57
      %p59 = scmp.ne.s32.totalorder %s47, %s48
      %p60 = scmp.eq.s32.totalorder %s17, 3
      %p61 = por %p59, %p60
      %p63 = scmp.ne.s32.totalorder %s48, %s62
      %p64 = scmp.eq.s32.totalorder %s17, 0
      %p65 = por %p63, %p64
      %s66 = ssub.s32 %s11, %s18
      %p67 = scmp.eq.s32.totalorder %s66, 0
      %s69 = sadd.s32 %s68, 1
      %s70 = scalar_select %p67, %s68, %s69
      %p73 = pneg %p67
      %p74 = scmp.eq.s32.totalorder %s11, 3
      %p75 = por %p73, %p74
      %p76 = scmp.ne.s32.totalorder %s68, %s71
      %p77 = scmp.eq.s32.totalorder %s11, 0
      %p78 = por %p76, %p77
      %p79 = scmp.ne.s32.totalorder %s68, %s71
      %p80 = scmp.eq.s32.totalorder %s16, 3
      %p81 = por %p79, %p80
      %p82 = scmp.ne.s32.totalorder %s71, %s72
      %p83 = scmp.eq.s32.totalorder %s16, 0
      %p84 = por %p82, %p83
      %p85 = scmp.ne.s32.totalorder %s71, %s72
      %p86 = scmp.eq.s32.totalorder %s17, 3
      %p87 = por %p85, %p86
      %p89 = scmp.ne.s32.totalorder %s72, %s88
      %p90 = scmp.eq.s32.totalorder %s17, 0
      %p91 = por %p89, %p90
      %p92 = scmp.le.s32.totalorder 1, %s11
      %p93 = scmp.lt.s32.totalorder %s11, 5
      %p94 = pnand %p92, %p93
      %p95 = pneg %p94
      // Predicated region
      $region9: #{tpu_custom_call.1} parent=5 // pred_check
        _
      $region10: #{tpu_custom_call.1} parent=5 // pred_check_branch
        %97 = sbr.rel (%p94) target = $region12
      $region11: #{tpu_custom_call.1} parent=5 // pred_region
        %s98 = ssub.s32 %s11, 1
        // Predicated region
        $region13: #{tpu_custom_call.1} parent=11 // pred_check
          %p99 = pneg %p58
        $region14: #{tpu_custom_call.1} parent=11 // pred_check_branch
          %101 = sbr.rel (%p99) target = $region16
        $region15: #{tpu_custom_call.1} parent=11 // pred_region
          _
        $region16: #{tpu_custom_call.1} parent=11 // pred_fallthru
          _
      $region12: #{tpu_custom_call.1} parent=5 // pred_fallthru
        _
      %p102 = scmp.lt.s32.totalorder %s11, 4
      // Predicated region
      $region17: #{tpu_custom_call.1} parent=5 // pred_check
        %p103 = pneg %p102
      $region18: #{tpu_custom_call.1} parent=5 // pred_check_branch
        %105 = sbr.rel (%p103) target = $region20
      $region19: #{tpu_custom_call.1} parent=5 // pred_region
        // Predicated region
        $region21: #{tpu_custom_call.1} parent=19 // pred_check
          %p106 = pneg %p31
        $region22: #{tpu_custom_call.1} parent=19 // pred_check_branch
          %108 = sbr.rel (%p106) target = $region24
        $region23: #{tpu_custom_call.1} parent=19 // pred_region
          %s109 = smul.u32 8, %s11
          %p110 = scmp.lt.s32.totalorder %s109, 31
          %s111 = scalar_select %p110, %s109, 31
          %s112 = smul.addr %s111, 8
          %s113 = scalar_lea.vmem %s0, %s112
          %s114 = smul.u32 8, %s11
        $region24: #{tpu_custom_call.1} parent=19 // pred_fallthru
          _
      $region20: #{tpu_custom_call.1} parent=5 // pred_fallthru
        _
      %p115 = scmp.le.s32.totalorder 1, %s11
      %p116 = scmp.lt.s32.totalorder %s11, 5
      %p117 = pnand %p115, %p116
      %p118 = pneg %p117
      // Predicated region
      $region25: #{tpu_custom_call.1} parent=5 // pred_check
        _
      $region26: #{tpu_custom_call.1} parent=5 // pred_check_branch
        %120 = sbr.rel (%p117) target = $region28
      $region27: #{tpu_custom_call.1} parent=5 // pred_region
        %s121 = ssub.s32 %s11, 1
        %s122 = smul.u32 8, %s16
        %p123 = scmp.lt.s32.totalorder %s122, 31
        %s124 = scalar_select %p123, %s122, 31
        %s125 = smul.addr %s124, 8
        %s126 = scalar_lea.vmem %s0, %s125
        %p127 = pneg %p37
        %p128 = pneg %p34
        %p129 = pneg %p58
        %p130 = pneg %p55
        %p131 = pneg %p84
        %p132 = pneg %p81
        %s133 = sand.u32 %s71, 1
        %s134 = scalar_lea.sflag [#allocation3], %s133
        %s135 = sand.u32 %s71, 1
        %s136 = smul.addr %s135, 64
        %s137 = scalar_lea.vmem [#allocation2], %s136
        %s138 = smul.u32 8, %s16
        %p139 = scmp.lt.s32.totalorder %s138, 31
        %s140 = scalar_select %p139, %s138, 31
        %s141 = smul.addr %s140, 8
        %s142 = scalar_lea.vmem %s0, %s141
        %s143 = smul.u32 8, %s16
        %s144 = smul.u32 8, %s16
        %v145 = vld [vmem:[%s142] sm:$0xff]
        %v146 = vld [vmem:[%s142 + $0x8] sm:$0xff]
        %v147 = vld [vmem:[%s142 + $0x10] sm:$0xff]
        %v148 = vld [vmem:[%s142 + $0x18] sm:$0xff]
        %v149 = vld [vmem:[%s142 + $0x20] sm:$0xff]
        %v150 = vld [vmem:[%s142 + $0x28] sm:$0xff]
        %v151 = vld [vmem:[%s142 + $0x30] sm:$0xff]
        %v152 = vld [vmem:[%s142 + $0x38] sm:$0xff]
        %v153 = vld [vmem:[%s1] sm:$0xff]
        %v154 = vld [vmem:[%s1 + $0x8] sm:$0xff]
        %v155 = vld [vmem:[%s1 + $0x10] sm:$0xff]
        %v156 = vld [vmem:[%s1 + $0x18] sm:$0xff]
        %v157 = vld [vmem:[%s1 + $0x20] sm:$0xff]
        %v158 = vld [vmem:[%s1 + $0x28] sm:$0xff]
        %v159 = vld [vmem:[%s1 + $0x30] sm:$0xff]
        %v160 = vld [vmem:[%s1 + $0x38] sm:$0xff]
        %v161 = vld [vmem:[%s1 + $0x40] sm:$0xff]
        %v162 = vld [vmem:[%s1 + $0x48] sm:$0xff]
        %v163 = vld [vmem:[%s1 + $0x50] sm:$0xff]
        %v164 = vld [vmem:[%s1 + $0x58] sm:$0xff]
        %v165 = vld [vmem:[%s1 + $0x60] sm:$0xff]
        %v166 = vld [vmem:[%s1 + $0x68] sm:$0xff]
        %v167 = vld [vmem:[%s1 + $0x70] sm:$0xff]
        %v168 = vld [vmem:[%s1 + $0x78] sm:$0xff]
        %v169 = vld [vmem:[%s1 + $0x80] sm:$0xff]
        %v170 = vld [vmem:[%s1 + $0x88] sm:$0xff]
        %v171 = vld [vmem:[%s1 + $0x90] sm:$0xff]
        %v172 = vld [vmem:[%s1 + $0x98] sm:$0xff]
        %v173 = vld [vmem:[%s1 + $0xa0] sm:$0xff]
        %v174 = vld [vmem:[%s1 + $0xa8] sm:$0xff]
        %v175 = vld [vmem:[%s1 + $0xb0] sm:$0xff]
        %v176 = vld [vmem:[%s1 + $0xb8] sm:$0xff]
        %v177 = vld [vmem:[%s1 + $0xc0] sm:$0xff]
        %v178 = vld [vmem:[%s1 + $0xc8] sm:$0xff]
        %v179 = vld [vmem:[%s1 + $0xd0] sm:$0xff]
        %v180 = vld [vmem:[%s1 + $0xd8] sm:$0xff]
        %v181 = vld [vmem:[%s1 + $0xe0] sm:$0xff]
        %v182 = vld [vmem:[%s1 + $0xe8] sm:$0xff]
        %v183 = vld [vmem:[%s1 + $0xf0] sm:$0xff]
        %v184 = vld [vmem:[%s1 + $0xf8] sm:$0xff]
        %v185 = vld [vmem:[%s1 + $0x100] sm:$0xff]
        %v186 = vld [vmem:[%s1 + $0x108] sm:$0xff]
        %v187 = vld [vmem:[%s1 + $0x110] sm:$0xff]
        %v188 = vperm.slane %v187, 0
        %vm189 = vcmask 130048
        %v191 = vsel %vm189, %v145, 0
        %v194 = vsel %vm189, %v146, 0
        %v197 = vsel %vm189, %v147, 0
        %v200 = vsel %vm189, %v148, 0
        %v203 = vsel %vm189, %v149, 0
        %v206 = vsel %vm189, %v150, 0
        %v209 = vsel %vm189, %v151, 0
        %v212 = vsel %vm189, %v152, 0
        %214 = vmatpush.msra.mxu0 0.0
        %215 = vmatpush.msra.mxu0 0.0
        %216 = vmatpush.msra.mxu0 0.0
        %217 = vmatpush.msra.mxu0 0.0
        %218 = vmatpush.msra.mxu0 0.0
        %219 = vmatpush.msra.mxu0 0.0
        %220 = vmatpush.msra.mxu0 0.0
        %221 = vmatpush.msra.mxu0 0.0
        %222 = vmatpush.msra.mxu0 0.0
        %223 = vmatpush.msra.mxu0 0.0
        %224 = vmatpush.msra.mxu0 0.0
        %225 = vmatpush.msra.mxu0 0.0
        %226 = vmatpush.msra.mxu0 0.0
        %227 = vmatpush.msra.mxu0 0.0
        %228 = vmatpush.msra.mxu0 %v154
        %229 = vmatpush.msra.mxu0 %v153
        %230 = vmatmul.f32.gmra.mxu0 %v191
        %v231 = vpop.f32.mrf.mxu0
        %v232 = vadd.f32 %v188, %v231
        %233 = vmatmul.f32.gmra.mxu0 %v194
        %v234 = vpop.f32.mrf.mxu0
        %v235 = vadd.f32 %v188, %v234
        %236 = vmatmul.f32.gmra.mxu0 %v197
        %v237 = vpop.f32.mrf.mxu0
        %v238 = vadd.f32 %v188, %v237
        %239 = vmatmul.f32.gmra.mxu0 %v200
        %v240 = vpop.f32.mrf.mxu0
        %v241 = vadd.f32 %v188, %v240
        %242 = vmatmul.f32.gmra.mxu0 %v203
        %v243 = vpop.f32.mrf.mxu0
        %v244 = vadd.f32 %v188, %v243
        %245 = vmatmul.f32.gmra.mxu0 %v206
        %v246 = vpop.f32.mrf.mxu0
        %v247 = vadd.f32 %v188, %v246
        %248 = vmatmul.f32.gmra.mxu0 %v209
        %v249 = vpop.f32.mrf.mxu0
        %v250 = vadd.f32 %v188, %v249
        %251 = vmatmul.f32.gmra.mxu0 %v212
        %v252 = vpop.f32.mrf.mxu0
        %v253 = vadd.f32 %v188, %v252
        %254 = vdwg.mxu0
        %v255 = vmax.f32 %v232, 0.0
        %v256 = vmax.f32 %v235, 0.0
        %v257 = vmax.f32 %v238, 0.0
        %v258 = vmax.f32 %v241, 0.0
        %v259 = vmax.f32 %v244, 0.0
        %v260 = vmax.f32 %v247, 0.0
        %v261 = vmax.f32 %v250, 0.0
        %v262 = vmax.f32 %v253, 0.0
        %v263 = vperm.slane %v187, 1
        %264 = vmatpush.msra.mxu0 %v170
        %265 = vmatpush.msra.mxu0 %v169
        %266 = vmatpush.msra.mxu0 %v168
        %267 = vmatpush.msra.mxu0 %v167
        %268 = vmatpush.msra.mxu0 %v166
        %269 = vmatpush.msra.mxu0 %v165
        %270 = vmatpush.msra.mxu0 %v164
        %271 = vmatpush.msra.mxu0 %v163
        %272 = vmatpush.msra.mxu0 %v162
        %273 = vmatpush.msra.mxu0 %v161
        %274 = vmatpush.msra.mxu0 %v160
        %275 = vmatpush.msra.mxu0 %v159
        %276 = vmatpush.msra.mxu0 %v158
        %277 = vmatpush.msra.mxu0 %v157
        %278 = vmatpush.msra.mxu0 %v156
        %279 = vmatpush.msra.mxu0 %v155
        %280 = vmatmul.f32.gmra.mxu0 %v255
        %v281 = vpop.f32.mrf.mxu0
        %v282 = vadd.f32 %v263, %v281
        %283 = vmatmul.f32.gmra.mxu0 %v256
        %v284 = vpop.f32.mrf.mxu0
        %v285 = vadd.f32 %v263, %v284
        %286 = vmatmul.f32.gmra.mxu0 %v257
        %v287 = vpop.f32.mrf.mxu0
        %v288 = vadd.f32 %v263, %v287
        %289 = vmatmul.f32.gmra.mxu0 %v258
        %v290 = vpop.f32.mrf.mxu0
        %v291 = vadd.f32 %v263, %v290
        %292 = vmatmul.f32.gmra.mxu0 %v259
        %v293 = vpop.f32.mrf.mxu0
        %v294 = vadd.f32 %v263, %v293
        %295 = vmatmul.f32.gmra.mxu0 %v260
        %v296 = vpop.f32.mrf.mxu0
        %v297 = vadd.f32 %v263, %v296
        %298 = vmatmul.f32.gmra.mxu0 %v261
        %v299 = vpop.f32.mrf.mxu0
        %v300 = vadd.f32 %v263, %v299
        %301 = vmatmul.f32.gmra.mxu0 %v262
        %v302 = vpop.f32.mrf.mxu0
        %v303 = vadd.f32 %v263, %v302
        %304 = vdwg.mxu0
        %v305 = vmax.f32 %v282, 0.0
        %v306 = vmax.f32 %v285, 0.0
        %v307 = vmax.f32 %v288, 0.0
        %v308 = vmax.f32 %v291, 0.0
        %v309 = vmax.f32 %v294, 0.0
        %v310 = vmax.f32 %v297, 0.0
        %v311 = vmax.f32 %v300, 0.0
        %v312 = vmax.f32 %v303, 0.0
        %v313 = vperm.slane %v187, 2
        %314 = vmatpush.msra.mxu0 %v186
        %315 = vmatpush.msra.mxu0 %v185
        %316 = vmatpush.msra.mxu0 %v184
        %317 = vmatpush.msra.mxu0 %v183
        %318 = vmatpush.msra.mxu0 %v182
        %319 = vmatpush.msra.mxu0 %v181
        %320 = vmatpush.msra.mxu0 %v180
        %321 = vmatpush.msra.mxu0 %v179
        %322 = vmatpush.msra.mxu0 %v178
        %323 = vmatpush.msra.mxu0 %v177
        %324 = vmatpush.msra.mxu0 %v176
        %325 = vmatpush.msra.mxu0 %v175
        %326 = vmatpush.msra.mxu0 %v174
        %327 = vmatpush.msra.mxu0 %v173
        %328 = vmatpush.msra.mxu0 %v172
        %329 = vmatpush.msra.mxu0 %v171
        %330 = vmatmul.f32.gmra.mxu0 %v305
        %v331 = vpop.f32.mrf.mxu0
        %v332 = vadd.f32 %v313, %v331
        %333 = vmatmul.f32.gmra.mxu0 %v306
        %v334 = vpop.f32.mrf.mxu0
        %v335 = vadd.f32 %v313, %v334
        %336 = vmatmul.f32.gmra.mxu0 %v307
        %v337 = vpop.f32.mrf.mxu0
        %v338 = vadd.f32 %v313, %v337
        %339 = vmatmul.f32.gmra.mxu0 %v308
        %v340 = vpop.f32.mrf.mxu0
        %v341 = vadd.f32 %v313, %v340
        %342 = vmatmul.f32.gmra.mxu0 %v309
        %v343 = vpop.f32.mrf.mxu0
        %v344 = vadd.f32 %v313, %v343
        %345 = vmatmul.f32.gmra.mxu0 %v310
        %v346 = vpop.f32.mrf.mxu0
        %v347 = vadd.f32 %v313, %v346
        %348 = vmatmul.f32.gmra.mxu0 %v311
        %v349 = vpop.f32.mrf.mxu0
        %v350 = vadd.f32 %v313, %v349
        %351 = vmatmul.f32.gmra.mxu0 %v312
        %v352 = vpop.f32.mrf.mxu0
        %v353 = vadd.f32 %v313, %v352
        %354 = vdwg.mxu0
        %v355 = vlaneseq
        %v356 = vand.u32 %v355, 127
        %vm357 = vcmp.lt.s32.totalorder %v356, 4
        %vm358 = vcmp.lt.s32.totalorder %v356, 8
        %v359 = vmul.f32 %v332, 2.0
        %v360 = vmul.f32 %v335, 2.0
        %v361 = vmul.f32 %v338, 2.0
        %v362 = vmul.f32 %v341, 2.0
        %v363 = vmul.f32 %v344, 2.0
        %v364 = vmul.f32 %v347, 2.0
        %v365 = vmul.f32 %v350, 2.0
        %v366 = vmul.f32 %v353, 2.0
        %v367 = vsel %vm357, %v359, %v332
        %v368 = vsel %vm357, %v360, %v335
        %v369 = vsel %vm357, %v361, %v338
        %v370 = vsel %vm357, %v362, %v341
        %v371 = vsel %vm357, %v363, %v344
        %v372 = vsel %vm357, %v364, %v347
        %v373 = vsel %vm357, %v365, %v350
        %v374 = vsel %vm357, %v366, %v353
        %v375 = vxor.u32 %v367, 2147483648
        %v376 = vxor.u32 %v368, 2147483648
        %v377 = vxor.u32 %v369, 2147483648
        %v378 = vxor.u32 %v370, 2147483648
        %v379 = vxor.u32 %v371, 2147483648
        %v380 = vxor.u32 %v372, 2147483648
        %v381 = vxor.u32 %v373, 2147483648
        %v382 = vxor.u32 %v374, 2147483648
        %v383 = vmul.f32 %v375, 1.442695
        %v384 = vpow.pop %v383
        %v385 = vmul.f32 %v376, 1.442695
        %v386 = vpow.pop %v385
        %v387 = vmul.f32 %v377, 1.442695
        %v388 = vpow.pop %v387
        %v389 = vmul.f32 %v378, 1.442695
        %v390 = vpow.pop %v389
        %v391 = vmul.f32 %v379, 1.442695
        %v392 = vpow.pop %v391
        %v393 = vmul.f32 %v380, 1.442695
        %v394 = vpow.pop %v393
        %v395 = vmul.f32 %v381, 1.442695
        %v396 = vpow.pop %v395
        %v397 = vmul.f32 %v382, 1.442695
        %v398 = vpow.pop %v397
        %v399 = vadd.f32 %v384, 1.0
        %v400 = vadd.f32 %v386, 1.0
        %v401 = vadd.f32 %v388, 1.0
        %v402 = vadd.f32 %v390, 1.0
        %v403 = vadd.f32 %v392, 1.0
        %v404 = vadd.f32 %v394, 1.0
        %v405 = vadd.f32 %v396, 1.0
        %v406 = vadd.f32 %v398, 1.0
        %v407 = vrcp.pop %v399
        %v408 = vmul.f32 %v399, %v407
        %v409 = vsub.f32 1.0, %v408
        %v410 = vmul.f32 %v407, %v409
        %v411 = vadd.f32 %v407, %v410
        %vm412 = vweird.f32 %v399
        %vm413 = vweird.f32 %v407
        %vm414 = vmor %vm412, %vm413
        %v415 = vsel %vm414, %v407, %v411
        %v416 = vand.u32 2147483647, %v399
        %vm417 = vcmp.eq.f32.partialorder %v416, 8.507059e+37
        %v418 = vand.u32 %v399, 2147483648
        %v419 = vor.u32 1.1754944e-38, %v418
        %v420 = vsel %vm417, %v419, %v415
        %v421 = vmul.f32 1.0, %v420
        %v422 = vrcp.pop %v400
        %v423 = vmul.f32 %v400, %v422
        %v424 = vsub.f32 1.0, %v423
        %v425 = vmul.f32 %v422, %v424
        %v426 = vadd.f32 %v422, %v425
        %vm427 = vweird.f32 %v400
        %vm428 = vweird.f32 %v422
        %vm429 = vmor %vm427, %vm428
        %v430 = vsel %vm429, %v422, %v426
        %v431 = vand.u32 2147483647, %v400
        %vm432 = vcmp.eq.f32.partialorder %v431, 8.507059e+37
        %v433 = vand.u32 %v400, 2147483648
        %v434 = vor.u32 1.1754944e-38, %v433
        %v435 = vsel %vm432, %v434, %v430
        %v436 = vmul.f32 1.0, %v435
        %v437 = vrcp.pop %v401
        %v438 = vmul.f32 %v401, %v437
        %v439 = vsub.f32 1.0, %v438
        %v440 = vmul.f32 %v437, %v439
        %v441 = vadd.f32 %v437, %v440
        %vm442 = vweird.f32 %v401
        %vm443 = vweird.f32 %v437
        %vm444 = vmor %vm442, %vm443
        %v445 = vsel %vm444, %v437, %v441
        %v446 = vand.u32 2147483647, %v401
        %vm447 = vcmp.eq.f32.partialorder %v446, 8.507059e+37
        %v448 = vand.u32 %v401, 2147483648
        %v449 = vor.u32 1.1754944e-38, %v448
        %v450 = vsel %vm447, %v449, %v445
        %v451 = vmul.f32 1.0, %v450
        %v452 = vrcp.pop %v402
        %v453 = vmul.f32 %v402, %v452
        %v454 = vsub.f32 1.0, %v453
        %v455 = vmul.f32 %v452, %v454
        %v456 = vadd.f32 %v452, %v455
        %vm457 = vweird.f32 %v402
        %vm458 = vweird.f32 %v452
        %vm459 = vmor %vm457, %vm458
        %v460 = vsel %vm459, %v452, %v456
        %v461 = vand.u32 2147483647, %v402
        %vm462 = vcmp.eq.f32.partialorder %v461, 8.507059e+37
        %v463 = vand.u32 %v402, 2147483648
        %v464 = vor.u32 1.1754944e-38, %v463
        %v465 = vsel %vm462, %v464, %v460
        %v466 = vmul.f32 1.0, %v465
        %v467 = vrcp.pop %v403
        %v468 = vmul.f32 %v403, %v467
        %v469 = vsub.f32 1.0, %v468
        %v470 = vmul.f32 %v467, %v469
        %v471 = vadd.f32 %v467, %v470
        %vm472 = vweird.f32 %v403
        %vm473 = vweird.f32 %v467
        %vm474 = vmor %vm472, %vm473
        %v475 = vsel %vm474, %v467, %v471
        %v476 = vand.u32 2147483647, %v403
        %vm477 = vcmp.eq.f32.partialorder %v476, 8.507059e+37
        %v478 = vand.u32 %v403, 2147483648
        %v479 = vor.u32 1.1754944e-38, %v478
        %v480 = vsel %vm477, %v479, %v475
        %v481 = vmul.f32 1.0, %v480
        %v482 = vrcp.pop %v404
        %v483 = vmul.f32 %v404, %v482
        %v484 = vsub.f32 1.0, %v483
        %v485 = vmul.f32 %v482, %v484
        %v486 = vadd.f32 %v482, %v485
        %vm487 = vweird.f32 %v404
        %vm488 = vweird.f32 %v482
        %vm489 = vmor %vm487, %vm488
        %v490 = vsel %vm489, %v482, %v486
        %v491 = vand.u32 2147483647, %v404
        %vm492 = vcmp.eq.f32.partialorder %v491, 8.507059e+37
        %v493 = vand.u32 %v404, 2147483648
        %v494 = vor.u32 1.1754944e-38, %v493
        %v495 = vsel %vm492, %v494, %v490
        %v496 = vmul.f32 1.0, %v495
        %v497 = vrcp.pop %v405
        %v498 = vmul.f32 %v405, %v497
        %v499 = vsub.f32 1.0, %v498
        %v500 = vmul.f32 %v497, %v499
        %v501 = vadd.f32 %v497, %v500
        %vm502 = vweird.f32 %v405
        %vm503 = vweird.f32 %v497
        %vm504 = vmor %vm502, %vm503
        %v505 = vsel %vm504, %v497, %v501
        %v506 = vand.u32 2147483647, %v405
        %vm507 = vcmp.eq.f32.partialorder %v506, 8.507059e+37
        %v508 = vand.u32 %v405, 2147483648
        %v509 = vor.u32 1.1754944e-38, %v508
        %v510 = vsel %vm507, %v509, %v505
        %v511 = vmul.f32 1.0, %v510
        %v512 = vrcp.pop %v406
        %v513 = vmul.f32 %v406, %v512
        %v514 = vsub.f32 1.0, %v513
        %v515 = vmul.f32 %v512, %v514
        %v516 = vadd.f32 %v512, %v515
        %vm517 = vweird.f32 %v406
        %vm518 = vweird.f32 %v512
        %vm519 = vmor %vm517, %vm518
        %v520 = vsel %vm519, %v512, %v516
        %v521 = vand.u32 2147483647, %v406
        %vm522 = vcmp.eq.f32.partialorder %v521, 8.507059e+37
        %v523 = vand.u32 %v406, 2147483648
        %v524 = vor.u32 1.1754944e-38, %v523
        %v525 = vsel %vm522, %v524, %v520
        %v526 = vmul.f32 1.0, %v525
        %v527 = vmul.f32 %v421, 2.0
        %v528 = vmul.f32 %v436, 2.0
        %v529 = vmul.f32 %v451, 2.0
        %v530 = vmul.f32 %v466, 2.0
        %v531 = vmul.f32 %v481, 2.0
        %v532 = vmul.f32 %v496, 2.0
        %v533 = vmul.f32 %v511, 2.0
        %v534 = vmul.f32 %v526, 2.0
        %v535 = vsub.f32 %v527, 1.0
        %v536 = vsub.f32 %v528, 1.0
        %v537 = vsub.f32 %v529, 1.0
        %v538 = vsub.f32 %v530, 1.0
        %v539 = vsub.f32 %v531, 1.0
        %v540 = vsub.f32 %v532, 1.0
        %v541 = vsub.f32 %v533, 1.0
        %v542 = vsub.f32 %v534, 1.0
        %v543 = vsel %vm357, %v535, %v421
        %v544 = vsel %vm357, %v536, %v436
        %v545 = vsel %vm357, %v537, %v451
        %v546 = vsel %vm357, %v538, %v466
        %v547 = vsel %vm357, %v539, %v481
        %v548 = vsel %vm357, %v540, %v496
        %v549 = vsel %vm357, %v541, %v511
        %v550 = vsel %vm357, %v542, %v526
        %v551 = vsel %vm358, %v543, %v332
        %v552 = vsel %vm358, %v544, %v335
        %v553 = vsel %vm358, %v545, %v338
        %v554 = vsel %vm358, %v546, %v341
        %v555 = vsel %vm358, %v547, %v344
        %v556 = vsel %vm358, %v548, %v347
        %v557 = vsel %vm358, %v549, %v350
        %v558 = vsel %vm358, %v550, %v353
        %559 = vst [vmem:[%s137] sm:$0xff] %v551
        %560 = vst [vmem:[%s137 + $0x8] sm:$0xff] %v552
        %561 = vst [vmem:[%s137 + $0x10] sm:$0xff] %v553
        %562 = vst [vmem:[%s137 + $0x18] sm:$0xff] %v554
        %563 = vst [vmem:[%s137 + $0x20] sm:$0xff] %v555
        %564 = vst [vmem:[%s137 + $0x28] sm:$0xff] %v556
        %565 = vst [vmem:[%s137 + $0x30] sm:$0xff] %v557
        %566 = vst [vmem:[%s137 + $0x38] sm:$0xff] %v558
        %s567 = sand.u32 %s71, 1
        %s568 = scalar_lea.sflag [#allocation3], %s567
        %s569 = sand.u32 %s71, 1
        %s570 = smul.addr %s569, 64
        %s571 = scalar_lea.vmem [#allocation2], %s570
        // Predicated region
        $region29: #{tpu_custom_call.1} parent=27 // pred_check
          %p572 = pneg %p81
        $region30: #{tpu_custom_call.1} parent=27 // pred_check_branch
          %574 = sbr.rel (%p572) target = $region32
        $region31: #{tpu_custom_call.1} parent=27 // pred_region
          %s575 = smul.u32 8, %s16
          %577 = vsyncadd %s568, 0
          %s578 = smul.addr %s575, 8
          %s579 = scalar_lea.hbm %s2, %s578
          %s580 = sshll.u32 %s571, 4
          %s581 = int_to_ptr.vmem [resolvable:$true] %s580
          %s582 = sshll.u32 %s579, 4
          %s583 = int_to_ptr.hbm [resolvable:$true] %s582
          %588 = dma.vmem_to_hbm [thread:$0]  %s581, 1024, %s583, %s568, 128, 128, 8
        $region32: #{tpu_custom_call.1} parent=27 // pred_fallthru
          _
      $region28: #{tpu_custom_call.1} parent=5 // pred_fallthru
        _
      %p589 = scmp.le.s32.totalorder 2, %s11
      // Predicated region
      $region33: #{tpu_custom_call.1} parent=5 // pred_check
        %p590 = pneg %p589
      $region34: #{tpu_custom_call.1} parent=5 // pred_check_branch
        %592 = sbr.rel (%p590) target = $region36
      $region35: #{tpu_custom_call.1} parent=5 // pred_region
        %s593 = ssub.s32 %s11, 2
        // Predicated region
        $region37: #{tpu_custom_call.1} parent=35 // pred_check
          %p594 = pneg %p87
        $region38: #{tpu_custom_call.1} parent=35 // pred_check_branch
          %596 = sbr.rel (%p594) target = $region40
        $region39: #{tpu_custom_call.1} parent=35 // pred_region
          %s597 = sand.u32 %s72, 1
          %s598 = scalar_lea.sflag [#allocation3], %s597
          %s599 = sand.u32 %s72, 1
          %s600 = smul.addr %s599, 64
          %s601 = scalar_lea.vmem [#allocation2], %s600
          %603 = dma.done %s598, 1024
        $region40: #{tpu_custom_call.1} parent=35 // pred_fallthru
          _
      $region36: #{tpu_custom_call.1} parent=5 // pred_fallthru
        _
    $region6: #{tpu_custom_call.1} parent=1 // loop_footer
      %s15 = sadd.s32 1, %s11
    $region7: #{tpu_custom_call.1} parent=1 // loop_footer_branch
      %10 = sbr.rel target = $region3
    $region8: #{tpu_custom_call.1} parent=1 // loop_exit
      _
    %604 = vsyncpa [#allocation3], 1
    %s605 = scalar_lea.sflag [#allocation3], 1
    %606 = vsyncpa %s605, 1

</llo_original>
